<compile_context>
chip_gen: v5e
topology: v5e:2x2
jax: 0.10.0
libtpu: 0.0.40
codegen_flags: <defaults>
</compile_context>

<pallas_src>
import math

import jax
import jax.numpy as jnp
from jax.experimental import pallas as pl
from jax.experimental.pallas import tpu as pltpu


def _round_up(x, m):
    return (x + m - 1) // m * m


def _erf_f32(z):
    # Abramowitz & Stegun 7.1.26 rational approximation of erf, max abs err ~1.5e-7.
    # Uses only VPU/EUP-friendly ops (abs, div, exp, fma, select) so it lowers cleanly.
    # TODO(synk): switch to a native erf lowering if/when Mosaic exposes one directly.
    p = 0.3275911
    a1, a2, a3, a4, a5 = (0.254829592, -0.284496736, 1.421413741,
                          -1.453152027, 1.061405429)
    az = jnp.abs(z)
    t = 1.0 / (1.0 + p * az)
    poly = ((((a5 * t + a4) * t + a3) * t + a2) * t + a1) * t
    y = 1.0 - poly * jnp.exp(-az * az)
    return jnp.where(z >= 0.0, y, -y)


def bert_intermediate_kernel(x_ref, w_ref, b_ref, o_ref):
    # x_ref: (TM, H)  (bf16 MXU operand)
    # w_ref: (H, TN)  (bf16 MXU operand; weight pre-transposed in the wrapper)
    # b_ref: (1, TN)  f32
    # o_ref: (TM, TN)
    acc = jnp.dot(x_ref[...], w_ref[...], preferred_element_type=jnp.float32)
    acc = acc + b_ref[...]                      # f32 bias, broadcast over rows
    # GELU (erf form): x * 0.5 * (1 + erf(x / sqrt(2))) — f32 epilogue on the accumulator.
    out = acc * 0.5 * (1.0 + _erf_f32(acc * 0.7071067811865476))
    o_ref[...] = out.astype(o_ref.dtype)


def bert_intermediate(hidden_states, weight, bias, *,
                      tile_rows=256, tile_cols=512, mxu_dtype=jnp.bfloat16):
    """hidden_states: (B, S, H); weight: (I, H) torch-style (out, in); bias: (I,)."""
    B, S, H = hidden_states.shape
    I = weight.shape[0]
    N = B * S
    out_dtype = hidden_states.dtype

    # --- row tiling: pad rows to a multiple of the tile instead of asserting ---
    tm = min(tile_rows, _round_up(N, 8))
    Np = _round_up(N, tm)
    x2 = hidden_states.reshape(N, H)
    if Np != N:
        x2 = jnp.pad(x2, ((0, Np - N), (0, 0)))

    # --- output-column tiling: tile at tile_cols when it divides I, else full I ---
    tn = tile_cols if (I >= tile_cols and I % tile_cols == 0) else I

    # Cast MXU operands ONCE on the host side (no per-grid-step casts in the kernel).
    x2 = x2.astype(mxu_dtype)
    w_t = weight.T.astype(mxu_dtype)            # (H, I): plain x @ w in-kernel
    b2 = bias.reshape(1, I).astype(jnp.float32)

    grid = (Np // tm, I // tn)

    in_bytes = jnp.dtype(mxu_dtype).itemsize
    out_bytes = jnp.dtype(out_dtype).itemsize
    # double-buffered tiles + f32 accumulator headroom
    est_vmem = 2 * (tm * H * in_bytes + H * tn * in_bytes + tn * 4 + tm * tn * out_bytes) \
        + 2 * tm * tn * 4
    vmem_limit = int(min(max(2 * est_vmem, 16 * 2**20), 64 * 2**20))

    cost = pl.CostEstimate(
        flops=2 * N * H * I,
        transcendentals=N * I,                  # one exp per output element (erf)
        bytes_accessed=N * H * in_bytes + H * I * in_bytes + I * 4 + N * I * out_bytes,
    )

    out2 = pl.pallas_call(
        bert_intermediate_kernel,
        out_shape=jax.ShapeDtypeStruct((Np, I), out_dtype),
        grid_spec=pltpu.PrefetchScalarGridSpec(
            num_scalar_prefetch=0,
            grid=grid,
            in_specs=[
                pl.BlockSpec((tm, H), lambda i, j: (i, 0)),   # activation row tile
                pl.BlockSpec((H, tn), lambda i, j: (0, j)),   # weight column tile
                pl.BlockSpec((1, tn), lambda i, j: (0, j)),   # bias column tile
            ],
            out_specs=pl.BlockSpec((tm, tn), lambda i, j: (i, j)),
        ),
        compiler_params=pltpu.CompilerParams(
            dimension_semantics=("parallel", "parallel"),
            vmem_limit_bytes=vmem_limit,
        ),
        cost_estimate=cost,
    )(x2, w_t, b2)

    return out2[:N].reshape(B, S, I)


def reference(hidden_states, weight, bias, mxu_dtype=jnp.bfloat16):
    # Matches the kernel's numerics: bf16 matmul operands, f32 accumulation/epilogue.
    x = jnp.einsum("bsh,ih->bsi",
                   hidden_states.astype(mxu_dtype), weight.astype(mxu_dtype),
                   preferred_element_type=jnp.float32)
    x = x + bias.astype(jnp.float32)
    out = x * 0.5 * (1.0 + jax.scipy.special.erf(x / math.sqrt(2.0)))
    return out.astype(hidden_states.dtype)


if __name__ == "__main__":
    key = jax.random.PRNGKey(0)
    B, S, H = 2, 8, 32
    I = 4 * H                                    # intermediate_size = 4 * hidden_size
    k1, k2, k3 = jax.random.split(key, 3)

    hidden_states = jax.random.normal(k1, (B, S, H), dtype=jnp.float32)
    # nn.Linear(H, I): weight (I, H), bias (I,)
    weight = jax.random.normal(k2, (I, H), dtype=jnp.float32) * (1.0 / math.sqrt(H))
    bias = jax.random.normal(k3, (I,), dtype=jnp.float32) * 0.01

    out = bert_intermediate(hidden_states, weight, bias)
    out = jax.block_until_ready(out)

    ref = reference(hidden_states, weight, bias)
    assert out.shape == (B, S, I)
    assert jnp.allclose(out, ref, atol=1e-3, rtol=1e-3), "mismatch vs reference"

    print("KERNEL_OK")
</pallas_src>

<mosaic_0001>
module attributes {stable_mosaic.version = 11 : i64} {
  func.func @bert_intermediate_kernel(%arg0: i32, %arg1: i32, %arg2: memref<16x32xbf16, #tpu.memory_space<vmem>>, %arg3: memref<32x128xbf16, #tpu.memory_space<vmem>>, %arg4: memref<1x128xf32, #tpu.memory_space<vmem>>, %arg5: memref<16x128xf32, #tpu.memory_space<vmem>>) attributes {dimension_semantics = [#tpu.dimension_semantics<parallel>, #tpu.dimension_semantics<parallel>], iteration_bounds = array<i64: 1, 1>, scalar_prefetch = 0 : i64, scratch_operands = 0 : i64, tpu.core_type = #tpu.core_type<tc>, window_params = [{transform_indices = @transform_0, window_bounds = array<i64: 16, 32>}, {transform_indices = @transform_1, window_bounds = array<i64: 32, 128>}, {transform_indices = @transform_2, window_bounds = array<i64: 1, 128>}, {transform_indices = @transform_3, window_bounds = array<i64: 16, 128>}]} {
    %c0 = arith.constant 0 : index
    %c0_0 = arith.constant 0 : index
    %0 = vector.load %arg2[%c0, %c0_0] : memref<16x32xbf16, #tpu.memory_space<vmem>>, vector<16x32xbf16>
    %c0_1 = arith.constant 0 : index
    %c0_2 = arith.constant 0 : index
    %1 = vector.load %arg3[%c0_1, %c0_2] : memref<32x128xbf16, #tpu.memory_space<vmem>>, vector<32x128xbf16>
    %cst = arith.constant dense<0.000000e+00> : vector<16x128xf32>
    %2 = tpu.matmul %0, %1, %cst {dimension_numbers = #tpu.dot_dimension_numbers<[1], [0], [0], [1], [0, 0, 1, 1], [], []>} : vector<16x32xbf16>, vector<32x128xbf16>, vector<16x128xf32> -> vector<16x128xf32>
    %c0_3 = arith.constant 0 : index
    %c0_4 = arith.constant 0 : index
    %3 = vector.load %arg4[%c0_3, %c0_4] : memref<1x128xf32, #tpu.memory_space<vmem>>, vector<1x128xf32>
    %4 = vector.broadcast %3 : vector<1x128xf32> to vector<16x128xf32>
    %5 = arith.addf %2, %4 : vector<16x128xf32>
    %cst_5 = arith.constant 5.000000e-01 : f32
    %6 = vector.broadcast %cst_5 : f32 to vector<16x128xf32>
    %7 = arith.mulf %5, %6 : vector<16x128xf32>
    %cst_6 = arith.constant 0.707106769 : f32
    %8 = vector.broadcast %cst_6 : f32 to vector<16x128xf32>
    %9 = arith.mulf %5, %8 : vector<16x128xf32>
    %10 = math.absf %9 : vector<16x128xf32>
    %cst_7 = arith.constant 0.327591091 : f32
    %11 = vector.broadcast %cst_7 : f32 to vector<16x128xf32>
    %12 = arith.mulf %11, %10 : vector<16x128xf32>
    %cst_8 = arith.constant 1.000000e+00 : f32
    %13 = vector.broadcast %cst_8 : f32 to vector<16x128xf32>
    %14 = arith.addf %13, %12 : vector<16x128xf32>
    %cst_9 = arith.constant 1.000000e+00 : f32
    %15 = vector.broadcast %cst_9 : f32 to vector<16x128xf32>
    %16 = arith.divf %15, %14 : vector<16x128xf32>
    %cst_10 = arith.constant 1.06140542 : f32
    %17 = vector.broadcast %cst_10 : f32 to vector<16x128xf32>
    %18 = arith.mulf %17, %16 : vector<16x128xf32>
    %cst_11 = arith.constant -1.45315206 : f32
    %19 = vector.broadcast %cst_11 : f32 to vector<16x128xf32>
    %20 = arith.addf %18, %19 : vector<16x128xf32>
    %21 = arith.mulf %20, %16 : vector<16x128xf32>
    %cst_12 = arith.constant 1.42141378 : f32
    %22 = vector.broadcast %cst_12 : f32 to vector<16x128xf32>
    %23 = arith.addf %21, %22 : vector<16x128xf32>
    %24 = arith.mulf %23, %16 : vector<16x128xf32>
    %cst_13 = arith.constant -0.284496725 : f32
    %25 = vector.broadcast %cst_13 : f32 to vector<16x128xf32>
    %26 = arith.addf %24, %25 : vector<16x128xf32>
    %27 = arith.mulf %26, %16 : vector<16x128xf32>
    %cst_14 = arith.constant 0.254829586 : f32
    %28 = vector.broadcast %cst_14 : f32 to vector<16x128xf32>
    %29 = arith.addf %27, %28 : vector<16x128xf32>
    %30 = arith.mulf %29, %16 : vector<16x128xf32>
    %cst_15 = arith.constant 0.000000e+00 : f32
    %31 = vector.broadcast %cst_15 : f32 to vector<16x128xf32>
    %32 = arith.subf %31, %10 : vector<16x128xf32>
    %33 = arith.mulf %32, %10 : vector<16x128xf32>
    %34 = math.exp %33 : vector<16x128xf32>
    %35 = arith.mulf %30, %34 : vector<16x128xf32>
    %cst_16 = arith.constant 1.000000e+00 : f32
    %36 = vector.broadcast %cst_16 : f32 to vector<16x128xf32>
    %37 = arith.subf %36, %35 : vector<16x128xf32>
    %cst_17 = arith.constant 0.000000e+00 : f32
    %38 = vector.broadcast %cst_17 : f32 to vector<16x128xf32>
    %39 = arith.cmpf oge, %9, %38 : vector<16x128xf32>
    %cst_18 = arith.constant 0.000000e+00 : f32
    %40 = vector.broadcast %cst_18 : f32 to vector<16x128xf32>
    %41 = arith.subf %40, %37 : vector<16x128xf32>
    %42 = arith.select %39, %37, %41 : vector<16x128xi1>, vector<16x128xf32>
    %cst_19 = arith.constant 1.000000e+00 : f32
    %43 = vector.broadcast %cst_19 : f32 to vector<16x128xf32>
    %44 = arith.addf %43, %42 : vector<16x128xf32>
    %45 = arith.mulf %7, %44 : vector<16x128xf32>
    %c0_20 = arith.constant 0 : index
    %c0_21 = arith.constant 0 : index
    %46 = vector.load %arg5[%c0_20, %c0_21] : memref<16x128xf32, #tpu.memory_space<vmem>>, vector<16x128xf32>
    tpu.vector_store %arg5[%c0_20, %c0_21], %45 {strides = array<i32>} : memref<16x128xf32, #tpu.memory_space<vmem>>, vector<16x128xf32>,
    return
  }
  func.func @transform_0(%arg0: i32, %arg1: i32) -> (i32, i32) {
    %c0_i32 = arith.constant 0 : i32
    %c0_i32_0 = arith.constant 0 : i32
    return %arg0, %c0_i32 : i32, i32
  }
  func.func @transform_1(%arg0: i32, %arg1: i32) -> (i32, i32) {
    %c0_i32 = arith.constant 0 : i32
    %c0_i32_0 = arith.constant 0 : i32
    return %c0_i32, %arg1 : i32, i32
  }
  func.func @transform_2(%arg0: i32, %arg1: i32) -> (i32, i32) {
    %c0_i32 = arith.constant 0 : i32
    %c0_i32_0 = arith.constant 0 : i32
    return %c0_i32, %arg1 : i32, i32
  }
  func.func @transform_3(%arg0: i32, %arg1: i32) -> (i32, i32) {
    %c0_i32 = arith.constant 0 : i32
    return %arg0, %arg1 : i32, i32
  }
}

</mosaic_0001>

<llo_original>
// kernel: tpu_custom_call.1
$region0: #{tpu_custom_call.1}
  #allocation0 [shape = 'u32[]', space=smem, size = 0x4, offset = 0x4, fixed_abs, tag = 'smem constant byte address 0x4 - core index']
  #allocation1 [shape = 'u32[72,128]{1,0:T(1,128)}', space=vmem, size = 0x9000, scoped, tag = 'internal scratch']
  %s0 = inlined_call_operand.hbm [shape: bf16[16,32], index: 0, kind: input, shape index: {}]
  %s1 = inlined_call_operand.hbm [shape: bf16[32,128], index: 1, kind: input, shape index: {}]
  %s2 = inlined_call_operand.vmem [shape: f32[1,128], index: 2, kind: input, shape index: {}]
  %s3 = inlined_call_operand.hbm [shape: f32[16,128], index: 3, kind: output, shape index: {}]
  %s4 = sld [smem:[#allocation0]]
  $region30: #{tpu_custom_call.1} parent=0
    _
  %s6 = ssub.s32 1, %s4
  %s7 = scalar_select 0, %s6, %s4
  $region1: #{tpu_custom_call.1} parent=0
    #allocation2 [shape = 'u8[4096]{0}', space=vmem, size = 0x1000, scoped, tag = 'input window, operand 0, single buffered']
    #allocation3 [shape = 's32[1]{0}', space=sflag, size = 0x4, scoped, tag = 'scoped memory for tpu_custom_call.1']
    #allocation4 [shape = 's32[1]{0}', space=sflag, size = 0x4, scoped, tag = 'scoped memory for tpu_custom_call.1']
    #allocation5 [shape = 'u8[8192]{0}', space=vmem, size = 0x2000, scoped, tag = 'input window, operand 1, single buffered']
    #allocation6 [shape = 's32[1]{0}', space=sflag, size = 0x4, scoped, tag = 'scoped memory for tpu_custom_call.1']
    #allocation7 [shape = 'u8[8192]{0}', space=vmem, size = 0x2000, scoped, tag = 'output window, operand 0, single buffered']
    %8 = vsyncpa [#allocation3], 0
    %9 = vsyncpa [#allocation6], 0
    %10 = vsyncpa [#allocation4], 0
    // Predicated region
    $region2: #{tpu_custom_call.1} parent=1 // pred_check
      _
    $region3: #{tpu_custom_call.1} parent=1 // pred_check_branch
      %12 = sbr.rel (0) target = $region5
    $region4: #{tpu_custom_call.1} parent=1 // pred_region
      %14 = vsyncadd [#allocation3], 0
      %s15 = sshll.u32 %s0, 4
      %s16 = int_to_ptr.hbm [resolvable:$true] %s15
      %s17 = sshll.u32 [#allocation2], 4
      %s18 = int_to_ptr.vmem [resolvable:$true] %s17
      %23 = dma.hbm_to_vmem [thread:$0]  %s16, 128, %s18, [#allocation3], 64, 64, 4
    $region5: #{tpu_custom_call.1} parent=1 // pred_fallthru
      _
    // Predicated region
    $region6: #{tpu_custom_call.1} parent=1 // pred_check
      _
    $region7: #{tpu_custom_call.1} parent=1 // pred_check_branch
      %25 = sbr.rel (0) target = $region9
    $region8: #{tpu_custom_call.1} parent=1 // pred_region
      %27 = vsyncadd [#allocation6], 0
      %s28 = sshll.u32 %s1, 4
      %s29 = int_to_ptr.hbm [resolvable:$true] %s28
      %s30 = sshll.u32 [#allocation5], 4
      %s31 = int_to_ptr.vmem [resolvable:$true] %s30
      %36 = dma.hbm_to_vmem [thread:$0]  %s29, 256, %s31, [#allocation6], 64, 64, 4
    $region9: #{tpu_custom_call.1} parent=1 // pred_fallthru
      _
    // Predicated region
    $region10: #{tpu_custom_call.1} parent=1 // pred_check
      _
    $region11: #{tpu_custom_call.1} parent=1 // pred_check_branch
      %38 = sbr.rel (0) target = $region13
    $region12: #{tpu_custom_call.1} parent=1 // pred_region
      _
    $region13: #{tpu_custom_call.1} parent=1 // pred_fallthru
      _
    // Predicated region
    $region14: #{tpu_custom_call.1} parent=1 // pred_check
      _
    $region15: #{tpu_custom_call.1} parent=1 // pred_check_branch
      %40 = sbr.rel (0) target = $region17
    $region16: #{tpu_custom_call.1} parent=1 // pred_region
      %42 = dma.done [#allocation3], 128
    $region17: #{tpu_custom_call.1} parent=1 // pred_fallthru
      _
    // Predicated region
    $region18: #{tpu_custom_call.1} parent=1 // pred_check
      _
    $region19: #{tpu_custom_call.1} parent=1 // pred_check_branch
      %44 = sbr.rel (0) target = $region21
    $region20: #{tpu_custom_call.1} parent=1 // pred_region
      %46 = dma.done [#allocation6], 256
    $region21: #{tpu_custom_call.1} parent=1 // pred_fallthru
      _
    %v48 = vld [vmem:[#allocation2] sm:$0xf]
    %v49 = vld [vmem:[#allocation2 + $0x4] sm:$0xf]
    %v50 = vld [vmem:[#allocation5] sm:$0xf]
    %v51 = vld [vmem:[#allocation5 + $0x4] sm:$0xf]
    %v52 = vld [vmem:[#allocation5 + $0x8] sm:$0xf]
    %v53 = vld [vmem:[#allocation5 + $0xc] sm:$0xf]
    %v54 = vld [vmem:[%s2] sm:$0x1]
    %v56 = vperm.slane %v54, 0
    %v60 = vunpack.c.l.b16 %v48
    %v61 = vunpack.c.l.b16 %v49
    %v62 = vpack.c.b16 %v61, %v60
    %v67 = vunpack.c.l.b16 %v50
    %v68 = vunpack.c.l.b16 %v51
    %v69 = vunpack.c.l.b16 %v52
    %v70 = vunpack.c.l.b16 %v53
    %v71 = vpack.c.b16 %v68, %v67
    %v72 = vpack.c.b16 %v70, %v69
    %vm75 = vcmask 261120
    %v77 = vsel %vm75, %v62, 0
    %79 = vmatpush.bf16.msra.mxu0 0
    %80 = vmatpush.bf16.msra.mxu0 0
    %81 = vmatpush.bf16.msra.mxu0 0
    %82 = vmatpush.bf16.msra.mxu0 0
    %83 = vmatpush.bf16.msra.mxu0 0
    %84 = vmatpush.bf16.msra.mxu0 0
    %85 = vmatpush.bf16.msra.mxu0 %v72
    %86 = vmatpush.bf16.msra.mxu0 %v71
    %87 = vmatmul.bf16.gmra.mxu0 %v77
    %v88 = vpop.f32.mrf.mxu0
    %v89 = vadd.f32 %v56, %v88
    %v90 = vpop.f32.mrf.mxu0
    %v91 = vadd.f32 %v56, %v90
    %92 = vdwg.mxu0
    %v93 = vmul.f32 %v89, 0.5
    %v94 = vmul.f32 %v91, 0.5
    %v95 = vmul.f32 %v89, 0.70710677
    %v96 = vmul.f32 %v91, 0.70710677
    %v97 = vand.u32 2147483647, %v95
    %v98 = vand.u32 2147483647, %v96
    %v99 = vmul.f32 %v97, 0.3275911
    %v100 = vmul.f32 %v98, 0.3275911
    %v101 = vadd.f32 %v99, 1.0
    %v102 = vadd.f32 %v100, 1.0
    %v103 = vrcp.pop %v101
    %v104 = vmul.f32 %v101, %v103
    %v105 = vsub.f32 1.0, %v104
    %v106 = vmul.f32 %v103, %v105
    %v107 = vadd.f32 %v103, %v106
    %vm108 = vweird.f32 %v101
    %vm109 = vweird.f32 %v103
    %vm110 = vmor %vm108, %vm109
    %v111 = vsel %vm110, %v103, %v107
    %v112 = vand.u32 2147483647, %v101
    %vm113 = vcmp.eq.f32.partialorder %v112, 8.507059e+37
    %v114 = vand.u32 %v101, 2147483648
    %v115 = vor.u32 1.1754944e-38, %v114
    %v116 = vsel %vm113, %v115, %v111
    %v117 = vmul.f32 1.0, %v116
    %v118 = vrcp.pop %v102
    %v119 = vmul.f32 %v102, %v118
    %v120 = vsub.f32 1.0, %v119
    %v121 = vmul.f32 %v118, %v120
    %v122 = vadd.f32 %v118, %v121
    %vm123 = vweird.f32 %v102
    %vm124 = vweird.f32 %v118
    %vm125 = vmor %vm123, %vm124
    %v126 = vsel %vm125, %v118, %v122
    %v127 = vand.u32 2147483647, %v102
    %vm128 = vcmp.eq.f32.partialorder %v127, 8.507059e+37
    %v129 = vand.u32 %v102, 2147483648
    %v130 = vor.u32 1.1754944e-38, %v129
    %v131 = vsel %vm128, %v130, %v126
    %v132 = vmul.f32 1.0, %v131
    %v133 = vmul.f32 %v117, 1.0614054
    %v134 = vmul.f32 %v132, 1.0614054
    %v135 = vadd.f32 %v133, -1.4531521
    %v136 = vadd.f32 %v134, -1.4531521
    %v137 = vmul.f32 %v135, %v117
    %v138 = vmul.f32 %v136, %v132
    %v139 = vadd.f32 %v137, 1.4214138
    %v140 = vadd.f32 %v138, 1.4214138
    %v141 = vmul.f32 %v139, %v117
    %v142 = vmul.f32 %v140, %v132
    %v143 = vadd.f32 %v141, -0.28449672
    %v144 = vadd.f32 %v142, -0.28449672
    %v145 = vmul.f32 %v143, %v117
    %v146 = vmul.f32 %v144, %v132
    %v147 = vadd.f32 %v145, 0.2548296
    %v148 = vadd.f32 %v146, 0.2548296
    %v149 = vmul.f32 %v147, %v117
    %v150 = vmul.f32 %v148, %v132
    %v151 = vsub.f32 0.0, %v97
    %v152 = vsub.f32 0.0, %v98
    %v153 = vmul.f32 %v151, %v97
    %v154 = vmul.f32 %v152, %v98
    %v155 = vmul.f32 %v153, 1.442695
    %v156 = vpow.pop %v155
    %v157 = vmul.f32 %v154, 1.442695
    %v158 = vpow.pop %v157
    %v159 = vmul.f32 %v149, %v156
    %v160 = vmul.f32 %v150, %v158
    %v161 = vsub.f32 1.0, %v159
    %v162 = vsub.f32 1.0, %v160
    %vm163 = vcmp.ge.f32.partialorder %v95, 0.0
    %vm164 = vcmp.ge.f32.partialorder %v96, 0.0
    %v165 = vsub.f32 0.0, %v161
    %v166 = vsub.f32 0.0, %v162
    %v167 = vsel %vm163, %v161, %v165
    %v168 = vsel %vm164, %v162, %v166
    %v169 = vadd.f32 %v167, 1.0
    %v170 = vadd.f32 %v168, 1.0
    %v171 = vmul.f32 %v93, %v169
    %v172 = vmul.f32 %v94, %v170
    %173 = vst [vmem:[#allocation7] sm:$0xff] %v171
    %174 = vst [vmem:[#allocation7 + $0x8] sm:$0xff] %v172
    // Predicated region
    $region22: #{tpu_custom_call.1} parent=1 // pred_check
      _
    $region23: #{tpu_custom_call.1} parent=1 // pred_check_branch
      %176 = sbr.rel (0) target = $region25
    $region24: #{tpu_custom_call.1} parent=1 // pred_region
      %178 = vsyncadd [#allocation4], 0
      %s179 = sshll.u32 [#allocation7], 4
      %s180 = int_to_ptr.vmem [resolvable:$true] %s179
      %s181 = sshll.u32 %s3, 4
      %s182 = int_to_ptr.hbm [resolvable:$true] %s181
      %187 = dma.vmem_to_hbm [thread:$0]  %s180, 256, %s182, [#allocation4], 128, 128, 8
    $region25: #{tpu_custom_call.1} parent=1 // pred_fallthru
      _
    // Predicated region
    $region26: #{tpu_custom_call.1} parent=1 // pred_check
      _
    $region27: #{tpu_custom_call.1} parent=1 // pred_check_branch
      %189 = sbr.rel (0) target = $region29
    $region28: #{tpu_custom_call.1} parent=1 // pred_region
      %191 = dma.done [#allocation4], 256
    $region29: #{tpu_custom_call.1} parent=1 // pred_fallthru
      _
    %192 = vsyncpa [#allocation3], 1
    %193 = vsyncpa [#allocation6], 1
    %194 = vsyncpa [#allocation4], 1

</llo_original>
